<compile_context>
chip_gen: v5e
topology: v5e:2x2
jax: 0.10.0
libtpu: 0.0.40
codegen_flags: <defaults>
</compile_context>

<pallas_src>
import math
import functools

import jax
import jax.numpy as jnp
from jax import lax
from jax.experimental import pallas as pl
from jax.experimental.pallas import tpu as pltpu


def _pick_tile(dim, cap):
    """Largest divisor of `dim` that is <= cap (full dim if it already fits)."""
    if dim <= cap:
        return dim
    t = cap
    while dim % t != 0:
        t //= 2
    return t


# ----------------------------------------------------------------------------
# Kernel 1: tiled dense layer  out = x @ W + b   (used for c_attn and c_proj)
# ----------------------------------------------------------------------------
def _linear_kernel(x_ref, w_ref, b_ref, o_ref, acc_ref):
    k = pl.program_id(2)

    @pl.when(k == 0)
    def _init():
        acc_ref[...] = jnp.zeros(acc_ref.shape, acc_ref.dtype)

    acc_ref[...] += jnp.dot(x_ref[...], w_ref[...],
                            preferred_element_type=jnp.float32)

    @pl.when(k == pl.num_programs(2) - 1)
    def _finalize():
        # bias add fused into the epilogue
        o_ref[...] = (acc_ref[...] + b_ref[...].astype(jnp.float32)
                      ).astype(o_ref.dtype)


def linear(x2d, w, b, *, tm_cap=256, tn_cap=256, tk_cap=512):
    M, K = x2d.shape
    K2, N = w.shape
    assert K == K2
    tm = _pick_tile(M, tm_cap)
    tn = _pick_tile(N, tn_cap)
    tk = _pick_tile(K, tk_cap)
    b2d = b.reshape(1, N)

    return pl.pallas_call(
        _linear_kernel,
        out_shape=jax.ShapeDtypeStruct((M, N), x2d.dtype),
        grid_spec=pltpu.PrefetchScalarGridSpec(
            num_scalar_prefetch=0,
            grid=(M // tm, N // tn, K // tk),
            in_specs=[
                pl.BlockSpec((tm, tk), lambda i, j, k: (i, k)),
                pl.BlockSpec((tk, tn), lambda i, j, k: (k, j)),
                pl.BlockSpec((1, tn), lambda i, j, k: (0, j)),
            ],
            out_specs=pl.BlockSpec((tm, tn), lambda i, j, k: (i, j)),
            scratch_shapes=[pltpu.VMEM((tm, tn), jnp.float32)],
        ),
        compiler_params=pltpu.CompilerParams(
            dimension_semantics=("parallel", "parallel", "arbitrary"),
            vmem_limit_bytes=32 * 1024 * 1024,
        ),
    )(x2d, w, b2d)


# ----------------------------------------------------------------------------
# Kernel 2: flash-attention (per batch/head, causal), online softmax
# ----------------------------------------------------------------------------
def _flash_attn_kernel(q_ref, k_ref, v_ref, o_ref, m_ref, l_ref, acc_ref):
    qi = pl.program_id(2)
    ki = pl.program_id(3)

    @pl.when(ki == 0)
    def _init():
        m_ref[...] = jnp.full(m_ref.shape, -jnp.inf, m_ref.dtype)
        l_ref[...] = jnp.zeros(l_ref.shape, l_ref.dtype)
        acc_ref[...] = jnp.zeros(acc_ref.shape, acc_ref.dtype)

    # Causal block skip: KV tiles strictly above the diagonal contribute
    # nothing; compute (and, via the clamped index_map, the HBM fetch) is
    # skipped for them.
    @pl.when(ki <= qi)
    def _compute():
        q = q_ref[0, 0]                      # (t, hd)
        k = k_ref[0, 0]                      # (t, hd)
        v = v_ref[0, 0]                      # (t, hd)
        t, hd = q.shape
        scale = 1.0 / math.sqrt(hd)

        s = jnp.dot(q, k.T, preferred_element_type=jnp.float32) * scale  # (t, t)

        # Global causal mask; for ki < qi every entry already satisfies
        # col <= row so this is a numerical no-op and only the diagonal
        # block is actually masked (small VPU cost vs. the MXU work).
        row = qi * t + lax.broadcasted_iota(jnp.int32, s.shape, 0)
        col = ki * t + lax.broadcasted_iota(jnp.int32, s.shape, 1)
        s = jnp.where(col <= row, s, -jnp.inf)

        m_prev = m_ref[...]                                   # (t, 1)
        m_new = jnp.maximum(m_prev, s.max(axis=-1, keepdims=True))
        alpha = jnp.exp(m_prev - m_new)
        p = jnp.exp(s - m_new)
        l_ref[...] = alpha * l_ref[...] + p.sum(axis=-1, keepdims=True)
        acc_ref[...] = alpha * acc_ref[...] + jnp.dot(
            p.astype(v.dtype), v, preferred_element_type=jnp.float32)
        m_ref[...] = m_new

    @pl.when(ki == pl.num_programs(3) - 1)
    def _finalize():
        # approx=False keeps full f32 precision; flip to approx=True for the
        # fast EUP vrcp path (slightly lower precision).
        inv_l = pl.reciprocal(l_ref[...], approx=False)
        o_ref[0, 0] = (acc_ref[...] * inv_l).astype(o_ref.dtype)


def flash_causal_attention(q, k, v, *, block_cap=128):
    # q, k, v: (B, H, T, hd)
    B, H, T, hd = q.shape
    t = _pick_tile(T, block_cap)             # same tile for q and kv blocks
    n_q = T // t
    n_kv = T // t

    q_spec = pl.BlockSpec((1, 1, t, hd), lambda b, h, qi, ki: (b, h, qi, 0))
    # Clamp skipped KV tiles to the diagonal tile: the block index does not
    # change for ki > qi, so Pallas does not issue a new HBM DMA for them.
    kv_spec = pl.BlockSpec(
        (1, 1, t, hd), lambda b, h, qi, ki: (b, h, jnp.minimum(ki, qi), 0))
    o_spec = pl.BlockSpec((1, 1, t, hd), lambda b, h, qi, ki: (b, h, qi, 0))

    return pl.pallas_call(
        _flash_attn_kernel,
        out_shape=jax.ShapeDtypeStruct((B, H, T, hd), q.dtype),
        grid_spec=pltpu.PrefetchScalarGridSpec(
            num_scalar_prefetch=0,
            grid=(B, H, n_q, n_kv),
            in_specs=[q_spec, kv_spec, kv_spec],
            out_specs=o_spec,
            scratch_shapes=[
                pltpu.VMEM((t, 1), jnp.float32),    # running max m
                pltpu.VMEM((t, 1), jnp.float32),    # running sum l
                pltpu.VMEM((t, hd), jnp.float32),   # output accumulator
            ],
        ),
        compiler_params=pltpu.CompilerParams(
            dimension_semantics=("parallel", "parallel", "parallel",
                                 "arbitrary"),
            vmem_limit_bytes=32 * 1024 * 1024,
        ),
    )(q, k, v)


# ----------------------------------------------------------------------------
# Full module forward (glue in plain JAX, hot paths in Pallas)
# ----------------------------------------------------------------------------
def casual_self_attention(x, params, n_head, *, attn_block_cap=128):
    B, T, C = x.shape
    hd = C // n_head

    # qkv = c_attn(x)   (tiled GEMM with fused bias)
    x2d = x.reshape(B * T, C)
    qkv = linear(x2d, params["w_attn"], params["b_attn"])        # (B*T, 3C)

    # single fused reshape/transpose instead of split + three transposes
    qkv = qkv.reshape(B, T, 3, n_head, hd).transpose(2, 0, 3, 1, 4)
    qh, kh, vh = qkv[0], qkv[1], qkv[2]                          # (B, H, T, hd)

    # causal flash attention
    yh = flash_causal_attention(qh, kh, vh, block_cap=attn_block_cap)

    # merge heads: (B, H, T, hd) -> (B, T, C)
    y = yh.transpose(0, 2, 1, 3).reshape(B, T, C)

    # y = c_proj(y)
    y2d = linear(y.reshape(B * T, C), params["w_proj"], params["b_proj"])
    return y2d.reshape(B, T, C)


# ----------------------------------------------------------------------------
# Pure-JAX reference for correctness check
# ----------------------------------------------------------------------------
def reference(x, params, n_head):
    B, T, C = x.shape
    hd = C // n_head
    qkv = x @ params["w_attn"] + params["b_attn"]
    q, k, v = jnp.split(qkv, 3, axis=2)
    q = q.reshape(B, T, n_head, hd).transpose(0, 2, 1, 3)
    k = k.reshape(B, T, n_head, hd).transpose(0, 2, 1, 3)
    v = v.reshape(B, T, n_head, hd).transpose(0, 2, 1, 3)
    att = (q @ jnp.swapaxes(k, -2, -1)) * (1.0 / math.sqrt(hd))
    mask = jnp.tril(jnp.ones((T, T), dtype=bool))
    att = jnp.where(mask[None, None], att, -jnp.inf)
    att = jax.nn.softmax(att, axis=-1)
    y = (att @ v).transpose(0, 2, 1, 3).reshape(B, T, C)
    return y @ params["w_proj"] + params["b_proj"]


if __name__ == "__main__":
    # Small config consistent with the module: n_embd divisible by n_head.
    # attn_block_cap=8 forces multiple q/kv tiles at T=16 so the online
    # softmax, diagonal masking and causal block-skip paths are exercised.
    B, T, C, n_head = 2, 16, 32, 4

    key = jax.random.PRNGKey(0)
    kx, k1, k2, k3, k4 = jax.random.split(key, 5)

    bound_attn = 1.0 / math.sqrt(C)
    params = {
        # stored as (in, out) so forward is x @ W + b (equals PyTorch's x @ W.T)
        "w_attn": jax.random.uniform(k1, (C, 3 * C), jnp.float32,
                                     -bound_attn, bound_attn),
        "b_attn": jax.random.uniform(k2, (3 * C,), jnp.float32,
                                     -bound_attn, bound_attn),
        "w_proj": jax.random.uniform(k3, (C, C), jnp.float32,
                                     -bound_attn, bound_attn),
        "b_proj": jax.random.uniform(k4, (C,), jnp.float32,
                                     -bound_attn, bound_attn),
    }

    x = jax.random.normal(kx, (B, T, C), dtype=jnp.float32)

    y = casual_self_attention(x, params, n_head, attn_block_cap=8)
    y = jax.block_until_ready(y)

    y_ref = reference(x, params, n_head)
    assert y.shape == (B, T, C)
    assert jnp.allclose(y, y_ref, atol=1e-4, rtol=1e-4), "mismatch vs reference"

    print("KERNEL_OK")
</pallas_src>

<mosaic_0001>
module attributes {stable_mosaic.version = 11 : i64} {
  func.func @_linear_kernel(%arg0: i32, %arg1: i32, %arg2: i32, %arg3: memref<32x32xf32, #tpu.memory_space<vmem>>, %arg4: memref<32x96xf32, #tpu.memory_space<vmem>>, %arg5: memref<1x96xf32, #tpu.memory_space<vmem>>, %arg6: memref<32x96xf32, #tpu.memory_space<vmem>>, %arg7: memref<32x96xf32, #tpu.memory_space<vmem>>) attributes {dimension_semantics = [#tpu.dimension_semantics<parallel>, #tpu.dimension_semantics<parallel>, #tpu.dimension_semantics<arbitrary>], iteration_bounds = array<i64: 1, 1, 1>, scalar_prefetch = 0 : i64, scratch_operands = 1 : i64, tpu.core_type = #tpu.core_type<tc>, window_params = [{transform_indices = @transform_0, window_bounds = array<i64: 32, 32>}, {transform_indices = @transform_1, window_bounds = array<i64: 32, 96>}, {transform_indices = @transform_2, window_bounds = array<i64: 1, 96>}, {transform_indices = @transform_3, window_bounds = array<i64: 32, 96>}]} {
    %c0_i32 = arith.constant 0 : i32
    %0 = arith.cmpi eq, %arg2, %c0_i32 : i32
    %1 = arith.extui %0 : i1 to i32
    %c0_i32_0 = arith.constant 0 : i32
    %2 = arith.cmpi ne, %1, %c0_i32_0 : i32
    scf.if %2 {
      %cst_10 = arith.constant 0.000000e+00 : f32
      %12 = vector.broadcast %cst_10 : f32 to vector<32x96xf32>
      %c0_11 = arith.constant 0 : index
      %c0_12 = arith.constant 0 : index
      %13 = vector.load %arg7[%c0_11, %c0_12] : memref<32x96xf32, #tpu.memory_space<vmem>>, vector<32x96xf32>
      tpu.vector_store %arg7[%c0_11, %c0_12], %12 {strides = array<i32>} : memref<32x96xf32, #tpu.memory_space<vmem>>, vector<32x96xf32>,
    } else {
    }
    %c0 = arith.constant 0 : index
    %c0_1 = arith.constant 0 : index
    %3 = vector.load %arg7[%c0, %c0_1] : memref<32x96xf32, #tpu.memory_space<vmem>>, vector<32x96xf32>
    %c0_2 = arith.constant 0 : index
    %c0_3 = arith.constant 0 : index
    %4 = vector.load %arg3[%c0_2, %c0_3] : memref<32x32xf32, #tpu.memory_space<vmem>>, vector<32x32xf32>
    %c0_4 = arith.constant 0 : index
    %c0_5 = arith.constant 0 : index
    %5 = vector.load %arg4[%c0_4, %c0_5] : memref<32x96xf32, #tpu.memory_space<vmem>>, vector<32x96xf32>
    %cst = arith.constant dense<0.000000e+00> : vector<32x96xf32>
    %6 = tpu.matmul %4, %5, %cst {dimension_numbers = #tpu.dot_dimension_numbers<[1], [0], [0], [1], [0, 0, 1, 1], [], []>} : vector<32x32xf32>, vector<32x96xf32>, vector<32x96xf32> -> vector<32x96xf32>
    %7 = arith.addf %3, %6 : vector<32x96xf32>
    %c0_6 = arith.constant 0 : index
    %c0_7 = arith.constant 0 : index
    %8 = vector.load %arg7[%c0_6, %c0_7] : memref<32x96xf32, #tpu.memory_space<vmem>>, vector<32x96xf32>
    tpu.vector_store %arg7[%c0_6, %c0_7], %7 {strides = array<i32>} : memref<32x96xf32, #tpu.memory_space<vmem>>, vector<32x96xf32>,
    %c0_i32_8 = arith.constant 0 : i32
    %9 = arith.cmpi eq, %arg2, %c0_i32_8 : i32
    %10 = arith.extui %9 : i1 to i32
    %c0_i32_9 = arith.constant 0 : i32
    %11 = arith.cmpi ne, %10, %c0_i32_9 : i32
    scf.if %11 {
      %c0_10 = arith.constant 0 : index
      %c0_11 = arith.constant 0 : index
      %12 = vector.load %arg7[%c0_10, %c0_11] : memref<32x96xf32, #tpu.memory_space<vmem>>, vector<32x96xf32>
      %c0_12 = arith.constant 0 : index
      %c0_13 = arith.constant 0 : index
      %13 = vector.load %arg5[%c0_12, %c0_13] : memref<1x96xf32, #tpu.memory_space<vmem>>, vector<1x96xf32>
      %14 = vector.broadcast %13 : vector<1x96xf32> to vector<32x96xf32>
      %15 = arith.addf %12, %14 : vector<32x96xf32>
      %c0_14 = arith.constant 0 : index
      %c0_15 = arith.constant 0 : index
      %16 = vector.load %arg6[%c0_14, %c0_15] : memref<32x96xf32, #tpu.memory_space<vmem>>, vector<32x96xf32>
      tpu.vector_store %arg6[%c0_14, %c0_15], %15 {strides = array<i32>} : memref<32x96xf32, #tpu.memory_space<vmem>>, vector<32x96xf32>,
    } else {
    }
    return
  }
  func.func @transform_0(%arg0: i32, %arg1: i32, %arg2: i32) -> (i32, i32) {
    %c0_i32 = arith.constant 0 : i32
    return %arg0, %arg2 : i32, i32
  }
  func.func @transform_1(%arg0: i32, %arg1: i32, %arg2: i32) -> (i32, i32) {
    %c0_i32 = arith.constant 0 : i32
    return %arg2, %arg1 : i32, i32
  }
  func.func @transform_2(%arg0: i32, %arg1: i32, %arg2: i32) -> (i32, i32) {
    %c0_i32 = arith.constant 0 : i32
    %c0_i32_0 = arith.constant 0 : i32
    return %c0_i32, %arg1 : i32, i32
  }
  func.func @transform_3(%arg0: i32, %arg1: i32, %arg2: i32) -> (i32, i32) {
    %c0_i32 = arith.constant 0 : i32
    return %arg0, %arg1 : i32, i32
  }
}

</mosaic_0001>

<llo_original>
// kernel: tpu_custom_call.1
$region0: #{tpu_custom_call.1}
  #allocation0 [shape = 'u32[]', space=smem, size = 0x4, offset = 0x4, fixed_abs, tag = 'smem constant byte address 0x4 - core index']
  #allocation1 [shape = 'u32[72,128]{1,0:T(1,128)}', space=vmem, size = 0x9000, scoped, tag = 'internal scratch']
  #allocation2 [shape = 'f32[32,96]{1,0:T(8,128)}', space=vmem, size = 0x4000, scoped, tag = 'scratch operand']
  %s0 = inlined_call_operand.hbm [shape: f32[32,32], index: 0, kind: input, shape index: {}]
  %s1 = inlined_call_operand.hbm [shape: f32[32,96], index: 1, kind: input, shape index: {}]
  %s2 = inlined_call_operand.vmem [shape: f32[1,96], index: 2, kind: input, shape index: {}]
  %s3 = inlined_call_operand.hbm [shape: f32[32,96], index: 3, kind: output, shape index: {}]
  %s4 = sld [smem:[#allocation0]]
  $region38: #{tpu_custom_call.1} parent=0
    _
  %s6 = ssub.s32 1, %s4
  %s7 = scalar_select 0, %s6, %s4
  $region1: #{tpu_custom_call.1} parent=0
    #allocation3 [shape = 'u8[16384]{0}', space=vmem, size = 0x4000, scoped, tag = 'input window, operand 0, single buffered']
    #allocation4 [shape = 's32[1]{0}', space=sflag, size = 0x4, scoped, tag = 'scoped memory for tpu_custom_call.1']
    #allocation5 [shape = 's32[1]{0}', space=sflag, size = 0x4, scoped, tag = 'scoped memory for tpu_custom_call.1']
    #allocation6 [shape = 'u8[16384]{0}', space=vmem, size = 0x4000, scoped, tag = 'input window, operand 1, single buffered']
    #allocation7 [shape = 's32[1]{0}', space=sflag, size = 0x4, scoped, tag = 'scoped memory for tpu_custom_call.1']
    #allocation8 [shape = 'u8[16384]{0}', space=vmem, size = 0x4000, scoped, tag = 'output window, operand 0, single buffered']
    %8 = vsyncpa [#allocation4], 0
    %9 = vsyncpa [#allocation7], 0
    %10 = vsyncpa [#allocation5], 0
    // Predicated region
    $region2: #{tpu_custom_call.1} parent=1 // pred_check
      _
    $region3: #{tpu_custom_call.1} parent=1 // pred_check_branch
      %12 = sbr.rel (0) target = $region5
    $region4: #{tpu_custom_call.1} parent=1 // pred_region
      %14 = vsyncadd [#allocation4], 0
      %s15 = sshll.u32 %s0, 4
      %s16 = int_to_ptr.hbm [resolvable:$true] %s15
      %s17 = sshll.u32 [#allocation3], 4
      %s18 = int_to_ptr.vmem [resolvable:$true] %s17
      %23 = dma.hbm_to_vmem [thread:$0]  %s16, 512, %s18, [#allocation4], 128, 128, 8
    $region5: #{tpu_custom_call.1} parent=1 // pred_fallthru
      _
    // Predicated region
    $region6: #{tpu_custom_call.1} parent=1 // pred_check
      _
    $region7: #{tpu_custom_call.1} parent=1 // pred_check_branch
      %25 = sbr.rel (0) target = $region9
    $region8: #{tpu_custom_call.1} parent=1 // pred_region
      %27 = vsyncadd [#allocation7], 0
      %s28 = sshll.u32 %s1, 4
      %s29 = int_to_ptr.hbm [resolvable:$true] %s28
      %s30 = sshll.u32 [#allocation6], 4
      %s31 = int_to_ptr.vmem [resolvable:$true] %s30
      %36 = dma.hbm_to_vmem [thread:$0]  %s29, 512, %s31, [#allocation7], 128, 128, 8
    $region9: #{tpu_custom_call.1} parent=1 // pred_fallthru
      _
    // Predicated region
    $region10: #{tpu_custom_call.1} parent=1 // pred_check
      _
    $region11: #{tpu_custom_call.1} parent=1 // pred_check_branch
      %38 = sbr.rel (0) target = $region13
    $region12: #{tpu_custom_call.1} parent=1 // pred_region
      _
    $region13: #{tpu_custom_call.1} parent=1 // pred_fallthru
      _
    // Predicated region
    $region14: #{tpu_custom_call.1} parent=1 // pred_check
      _
    $region15: #{tpu_custom_call.1} parent=1 // pred_check_branch
      %40 = sbr.rel (0) target = $region17
    $region16: #{tpu_custom_call.1} parent=1 // pred_region
      %42 = dma.done [#allocation4], 512
    $region17: #{tpu_custom_call.1} parent=1 // pred_fallthru
      _
    // Predicated region
    $region18: #{tpu_custom_call.1} parent=1 // pred_check
      _
    $region19: #{tpu_custom_call.1} parent=1 // pred_check_branch
      %44 = sbr.rel (0) target = $region21
    $region20: #{tpu_custom_call.1} parent=1 // pred_region
      %46 = dma.done [#allocation7], 512
    $region21: #{tpu_custom_call.1} parent=1 // pred_fallthru
      _
    %p47 = scmp.eq.s32.totalorder 0, 0
    // Predicated region
    $region22: #{tpu_custom_call.1} parent=1 // pred_check
      %p48 = pneg %p47
    $region23: #{tpu_custom_call.1} parent=1 // pred_check_branch
      %50 = sbr.rel (%p48) target = $region25
    $region24: #{tpu_custom_call.1} parent=1 // pred_region
      %vm51 = vcmask 785408
      %52 = vst.msk [vmem:[#allocation2] sm:$0xff] %vm51, 0.0
      %53 = vst.msk [vmem:[#allocation2 + $0x8] sm:$0xff] %vm51, 0.0
      %54 = vst.msk [vmem:[#allocation2 + $0x10] sm:$0xff] %vm51, 0.0
      %55 = vst.msk [vmem:[#allocation2 + $0x18] sm:$0xff] %vm51, 0.0
    $region25: #{tpu_custom_call.1} parent=1 // pred_fallthru
      _
    %v56 = vld [vmem:[#allocation2] sm:$0xff]
    %v57 = vld [vmem:[#allocation2 + $0x8] sm:$0xff]
    %v58 = vld [vmem:[#allocation2 + $0x10] sm:$0xff]
    %v59 = vld [vmem:[#allocation2 + $0x18] sm:$0xff]
    %v60 = vld [vmem:[#allocation3] sm:$0xff]
    %v61 = vld [vmem:[#allocation3 + $0x8] sm:$0xff]
    %v62 = vld [vmem:[#allocation3 + $0x10] sm:$0xff]
    %v63 = vld [vmem:[#allocation3 + $0x18] sm:$0xff]
    %v64 = vld [vmem:[#allocation6] sm:$0xff]
    %v65 = vld [vmem:[#allocation6 + $0x8] sm:$0xff]
    %v66 = vld [vmem:[#allocation6 + $0x10] sm:$0xff]
    %v67 = vld [vmem:[#allocation6 + $0x18] sm:$0xff]
    %vm68 = vcmask 261120
    %v70 = vsel %vm68, %v60, 0
    %v73 = vsel %vm68, %v61, 0
    %v76 = vsel %vm68, %v62, 0
    %v79 = vsel %vm68, %v63, 0
    %81 = vmatpush.msra.mxu0 0.0
    %82 = vmatpush.msra.mxu0 0.0
    %83 = vmatpush.msra.mxu0 0.0
    %84 = vmatpush.msra.mxu0 0.0
    %85 = vmatpush.msra.mxu0 0.0
    %86 = vmatpush.msra.mxu0 0.0
    %87 = vmatpush.msra.mxu0 0.0
    %88 = vmatpush.msra.mxu0 0.0
    %89 = vmatpush.msra.mxu0 0.0
    %90 = vmatpush.msra.mxu0 0.0
    %91 = vmatpush.msra.mxu0 0.0
    %92 = vmatpush.msra.mxu0 0.0
    %93 = vmatpush.msra.mxu0 %v67
    %94 = vmatpush.msra.mxu0 %v66
    %95 = vmatpush.msra.mxu0 %v65
    %96 = vmatpush.msra.mxu0 %v64
    %97 = vmatmul.f32.gmra.mxu0 %v70
    %v98 = vpop.f32.mrf.mxu0
    %v99 = vadd.f32 0.0, %v98
    %100 = vmatmul.f32.gmra.mxu0 %v73
    %v101 = vpop.f32.mrf.mxu0
    %v102 = vadd.f32 0.0, %v101
    %103 = vmatmul.f32.gmra.mxu0 %v76
    %v104 = vpop.f32.mrf.mxu0
    %v105 = vadd.f32 0.0, %v104
    %106 = vmatmul.f32.gmra.mxu0 %v79
    %v107 = vpop.f32.mrf.mxu0
    %v108 = vadd.f32 0.0, %v107
    %109 = vdwg.mxu0
    %v110 = vadd.f32 %v56, %v99
    %v111 = vadd.f32 %v57, %v102
    %v112 = vadd.f32 %v58, %v105
    %v113 = vadd.f32 %v59, %v108
    %vm114 = vcmask 785408
    %115 = vst.msk [vmem:[#allocation2] sm:$0xff] %vm114, %v110
    %116 = vst.msk [vmem:[#allocation2 + $0x8] sm:$0xff] %vm114, %v111
    %117 = vst.msk [vmem:[#allocation2 + $0x10] sm:$0xff] %vm114, %v112
    %118 = vst.msk [vmem:[#allocation2 + $0x18] sm:$0xff] %vm114, %v113
    // Predicated region
    $region26: #{tpu_custom_call.1} parent=1 // pred_check
      %p119 = pneg %p47
    $region27: #{tpu_custom_call.1} parent=1 // pred_check_branch
      %121 = sbr.rel (%p119) target = $region29
    $region28: #{tpu_custom_call.1} parent=1 // pred_region
      %v122 = vld [vmem:[#allocation2] sm:$0xff]
      %v123 = vld [vmem:[#allocation2 + $0x8] sm:$0xff]
      %v124 = vld [vmem:[#allocation2 + $0x10] sm:$0xff]
      %v125 = vld [vmem:[#allocation2 + $0x18] sm:$0xff]
      %v126 = vld [vmem:[%s2] sm:$0x1]
      %v128 = vperm.slane %v126, 0
      %v130 = vadd.f32 %v122, %v128
      %v131 = vadd.f32 %v123, %v128
      %v132 = vadd.f32 %v124, %v128
      %v133 = vadd.f32 %v125, %v128
      %134 = vst.msk [vmem:[#allocation8] sm:$0xff] %vm114, %v130
      %135 = vst.msk [vmem:[#allocation8 + $0x8] sm:$0xff] %vm114, %v131
      %136 = vst.msk [vmem:[#allocation8 + $0x10] sm:$0xff] %vm114, %v132
      %137 = vst.msk [vmem:[#allocation8 + $0x18] sm:$0xff] %vm114, %v133
    $region29: #{tpu_custom_call.1} parent=1 // pred_fallthru
      _
    // Predicated region
    $region30: #{tpu_custom_call.1} parent=1 // pred_check
      _
    $region31: #{tpu_custom_call.1} parent=1 // pred_check_branch
      %139 = sbr.rel (0) target = $region33
    $region32: #{tpu_custom_call.1} parent=1 // pred_region
      %141 = vsyncadd [#allocation5], 0
      %s142 = sshll.u32 [#allocation8], 4
      %s143 = int_to_ptr.vmem [resolvable:$true] %s142
      %s144 = sshll.u32 %s3, 4
      %s145 = int_to_ptr.hbm [resolvable:$true] %s144
      %150 = dma.vmem_to_hbm [thread:$0]  %s143, 512, %s145, [#allocation5], 128, 128, 8
    $region33: #{tpu_custom_call.1} parent=1 // pred_fallthru
      _
    // Predicated region
    $region34: #{tpu_custom_call.1} parent=1 // pred_check
      _
    $region35: #{tpu_custom_call.1} parent=1 // pred_check_branch
      %152 = sbr.rel (0) target = $region37
    $region36: #{tpu_custom_call.1} parent=1 // pred_region
      %154 = dma.done [#allocation5], 512
    $region37: #{tpu_custom_call.1} parent=1 // pred_fallthru
      _
    %155 = vsyncpa [#allocation4], 1
    %156 = vsyncpa [#allocation7], 1
    %157 = vsyncpa [#allocation5], 1

</llo_original>
